<compile_context>
chip_gen: v6e
topology: v6e:2x2x1
jax: 0.10.0
libtpu: 0.0.40
codegen_flags: <defaults>
</compile_context>

<pallas_src>
import jax
import jax.numpy as jnp
import numpy as np
from jax.experimental import pallas as pl
from jax.experimental.pallas import tpu as pltpu


def _round_up(n, m):
    return ((n + m - 1) // m) * m


def dqn_kernel(x_ref, w1_ref, b1_ref, w2_ref, b2_ref, w3_ref, b3_ref, o_ref):
    # x arrives f32; cast to bf16 in-VMEM (fused, no extra HBM pass).
    x_bf = x_ref[...].astype(jnp.bfloat16)
    # Layer 1: Linear(D_in, 128) + ReLU   (bf16 MXU inputs, f32 accumulate)
    h1 = jnp.dot(x_bf, w1_ref[...], preferred_element_type=jnp.float32)
    h1 = jnp.maximum(h1 + b1_ref[...], 0.0)                 # f32 elementwise
    # Layer 2: Linear(128, 64) + ReLU
    h2 = jnp.dot(h1.astype(jnp.bfloat16), w2_ref[...],
                 preferred_element_type=jnp.float32)
    h2 = jnp.maximum(h2 + b2_ref[...], 0.0)                 # f32 elementwise
    # Layer 3: Linear(64, num_actions), no activation
    out = jnp.dot(h2.astype(jnp.bfloat16), w3_ref[...],
                  preferred_element_type=jnp.float32)
    o_ref[...] = (out + b3_ref[...]).astype(o_ref.dtype)


def dqn_forward(x, params, *, tb_max=2048, tile_vmem_budget=16 << 20):
    """x: [B, D_in] float32.  params: dict of [in, out] weights + [1, out] biases."""
    w1, b1 = params["w1"], params["b1"]
    w2, b2 = params["w2"], params["b2"]
    w3, b3 = params["w3"], params["b3"]

    B, d_in = x.shape
    h1_dim = w1.shape[1]          # 128
    h2_dim = w2.shape[1]          # 64
    num_actions = w3.shape[1]     # e.g. 4

    # bf16 MXU inputs for the weights; biases stay f32; x is cast in-kernel.
    w1_bf = w1.astype(jnp.bfloat16)
    w2_bf = w2.astype(jnp.bfloat16)
    w3_bf = w3.astype(jnp.bfloat16)

    # ---- Batch-tile selection (VMEM-budget driven, no input padding) -------
    granule = 8                               # f32 sublane granule
    # Double-buffered x (f32) + out (f32) tiles per row.
    per_row_bytes = 2 * 4 * (d_in + num_actions)
    tb_budget = max(granule,
                    (tile_vmem_budget // per_row_bytes) // granule * granule)
    if B <= granule:
        tb = B                                # single block == full array (legal)
    else:
        # Aim for >= 2 grid steps so both TensorCores get work on v7x.
        tb_two_steps = _round_up(pl.cdiv(B, 2), granule)
        tb = max(granule, min(tb_max, tb_budget, tb_two_steps))
    grid = (pl.cdiv(B, tb),)                  # ragged last block handled by Pallas

    # Resident operands are conservatively counted double-buffered.
    weight_bytes = 2 * (d_in * h1_dim * 2 + h1_dim * 4 +
                        h1_dim * h2_dim * 2 + h2_dim * 4 +
                        h2_dim * num_actions * 2 + num_actions * 4)
    footprint = weight_bytes + tb * per_row_bytes
    vmem_limit = int(min(max(2 * footprint, 32 << 20), 56 << 20))

    # Weights/biases: constant index_map -> loaded once, resident across steps.
    resident = lambda shape: pl.BlockSpec(shape, lambda i: (0, 0))

    out = pl.pallas_call(
        dqn_kernel,
        out_shape=jax.ShapeDtypeStruct((B, num_actions), jnp.float32),
        grid=grid,
        in_specs=[
            pl.BlockSpec((tb, d_in), lambda i: (i, 0)),   # x: tiled over batch
            resident((d_in, h1_dim)),                     # w1
            resident((1, h1_dim)),                        # b1
            resident((h1_dim, h2_dim)),                   # w2
            resident((1, h2_dim)),                        # b2
            resident((h2_dim, num_actions)),              # w3 (true width)
            resident((1, num_actions)),                   # b3 (true width)
        ],
        out_specs=pl.BlockSpec((tb, num_actions), lambda i: (i, 0)),
        compiler_params=pltpu.CompilerParams(
            dimension_semantics=("parallel",),            # 2 TCs on v7x
            vmem_limit_bytes=vmem_limit),
    )(x, w1_bf, b1, w2_bf, b2, w3_bf, b3)

    return out


def init_dqn_params(key, input_shape, num_actions):
    """Deterministic init mimicking PyTorch nn.Linear default (Kaiming uniform),
    with weights stored as [in, out] (transposed vs. torch's [out, in])."""
    dims = [(input_shape, 128), (128, 64), (64, num_actions)]
    params = {}
    for i, (fan_in, fan_out) in enumerate(dims, start=1):
        key, kw, kb = jax.random.split(key, 3)
        bound = 1.0 / np.sqrt(fan_in)
        params[f"w{i}"] = jax.random.uniform(
            kw, (fan_in, fan_out), jnp.float32, -bound, bound)
        params[f"b{i}"] = jax.random.uniform(
            kb, (1, fan_out), jnp.float32, -bound, bound)
    return params


def dqn_reference(x, params):
    """Pure-JAX reference using the same bf16-input / f32-accumulate math."""
    w1_bf = params["w1"].astype(jnp.bfloat16)
    w2_bf = params["w2"].astype(jnp.bfloat16)
    w3_bf = params["w3"].astype(jnp.bfloat16)
    h1 = jnp.dot(x.astype(jnp.bfloat16), w1_bf,
                 preferred_element_type=jnp.float32)
    h1 = jnp.maximum(h1 + params["b1"], 0.0)
    h2 = jnp.dot(h1.astype(jnp.bfloat16), w2_bf,
                 preferred_element_type=jnp.float32)
    h2 = jnp.maximum(h2 + params["b2"], 0.0)
    out = jnp.dot(h2.astype(jnp.bfloat16), w3_bf,
                  preferred_element_type=jnp.float32)
    return out + params["b3"]


if __name__ == "__main__":
    key = jax.random.PRNGKey(0)
    input_shape, num_actions = 16, 4

    kx, kp, kx2 = jax.random.split(key, 3)
    params = init_dqn_params(kp, input_shape, num_actions)

    # Small required case: batch = 2 (single full-array block).
    x = jax.random.normal(kx, (2, input_shape), dtype=jnp.float32)
    q = jax.block_until_ready(dqn_forward(x, params))
    q_ref = dqn_reference(x, params)
    np.testing.assert_allclose(np.asarray(q), np.asarray(q_ref),
                               rtol=1e-3, atol=1e-3)

    # Ragged multi-step grid case (exercises pad-free boundary handling).
    x2 = jax.random.normal(kx2, (20, input_shape), dtype=jnp.float32)
    q2 = jax.block_until_ready(dqn_forward(x2, params))
    q2_ref = dqn_reference(x2, params)
    np.testing.assert_allclose(np.asarray(q2), np.asarray(q2_ref),
                               rtol=1e-3, atol=1e-3)

    print("KERNEL_OK")
</pallas_src>

<mosaic_0001>
module attributes {stable_mosaic.version = 11 : i64} {
  func.func @dqn_kernel(%arg0: i32, %arg1: memref<2x16xf32, #tpu.memory_space<vmem>>, %arg2: memref<16x128xbf16, #tpu.memory_space<vmem>>, %arg3: memref<1x128xf32, #tpu.memory_space<vmem>>, %arg4: memref<128x64xbf16, #tpu.memory_space<vmem>>, %arg5: memref<1x64xf32, #tpu.memory_space<vmem>>, %arg6: memref<64x4xbf16, #tpu.memory_space<vmem>>, %arg7: memref<1x4xf32, #tpu.memory_space<vmem>>, %arg8: memref<2x4xf32, #tpu.memory_space<vmem>>) attributes {dimension_semantics = [#tpu.dimension_semantics<parallel>], iteration_bounds = array<i64: 1>, scalar_prefetch = 0 : i64, scratch_operands = 0 : i64, tpu.core_type = #tpu.core_type<tc>, window_params = [{transform_indices = @transform_0, window_bounds = array<i64: 2, 16>}, {pipeline_mode = #tpu.pipeline_mode<synchronous>, transform_indices = @transform_1, window_bounds = array<i64: 16, 128>}, {pipeline_mode = #tpu.pipeline_mode<synchronous>, transform_indices = @transform_2, window_bounds = array<i64: 1, 128>}, {pipeline_mode = #tpu.pipeline_mode<synchronous>, transform_indices = @transform_3, window_bounds = array<i64: 128, 64>}, {pipeline_mode = #tpu.pipeline_mode<synchronous>, transform_indices = @transform_4, window_bounds = array<i64: 1, 64>}, {pipeline_mode = #tpu.pipeline_mode<synchronous>, transform_indices = @transform_5, window_bounds = array<i64: 64, 4>}, {pipeline_mode = #tpu.pipeline_mode<synchronous>, transform_indices = @transform_6, window_bounds = array<i64: 1, 4>}, {transform_indices = @transform_7, window_bounds = array<i64: 2, 4>}]} {
    %c0 = arith.constant 0 : index
    %c0_0 = arith.constant 0 : index
    %0 = vector.load %arg1[%c0, %c0_0] : memref<2x16xf32, #tpu.memory_space<vmem>>, vector<2x16xf32>
    %1 = arith.truncf %0 : vector<2x16xf32> to vector<2x16xbf16>
    %c0_1 = arith.constant 0 : index
    %c0_2 = arith.constant 0 : index
    %2 = vector.load %arg2[%c0_1, %c0_2] : memref<16x128xbf16, #tpu.memory_space<vmem>>, vector<16x128xbf16>
    %cst = arith.constant dense<0.000000e+00> : vector<2x128xf32>
    %3 = tpu.matmul %1, %2, %cst {dimension_numbers = #tpu.dot_dimension_numbers<[1], [0], [0], [1], [0, 0, 1, 1], [], []>} : vector<2x16xbf16>, vector<16x128xbf16>, vector<2x128xf32> -> vector<2x128xf32>
    %c0_3 = arith.constant 0 : index
    %c0_4 = arith.constant 0 : index
    %4 = vector.load %arg3[%c0_3, %c0_4] : memref<1x128xf32, #tpu.memory_space<vmem>>, vector<1x128xf32>
    %5 = vector.broadcast %4 : vector<1x128xf32> to vector<2x128xf32>
    %6 = arith.addf %3, %5 : vector<2x128xf32>
    %cst_5 = arith.constant 0.000000e+00 : f32
    %7 = vector.broadcast %cst_5 : f32 to vector<2x128xf32>
    %8 = arith.maximumf %6, %7 : vector<2x128xf32>
    %9 = arith.truncf %8 : vector<2x128xf32> to vector<2x128xbf16>
    %c0_6 = arith.constant 0 : index
    %c0_7 = arith.constant 0 : index
    %10 = vector.load %arg4[%c0_6, %c0_7] : memref<128x64xbf16, #tpu.memory_space<vmem>>, vector<128x64xbf16>
    %cst_8 = arith.constant dense<0.000000e+00> : vector<2x64xf32>
    %11 = tpu.matmul %9, %10, %cst_8 {dimension_numbers = #tpu.dot_dimension_numbers<[1], [0], [0], [1], [0, 0, 1, 1], [], []>} : vector<2x128xbf16>, vector<128x64xbf16>, vector<2x64xf32> -> vector<2x64xf32>
    %c0_9 = arith.constant 0 : index
    %c0_10 = arith.constant 0 : index
    %12 = vector.load %arg5[%c0_9, %c0_10] : memref<1x64xf32, #tpu.memory_space<vmem>>, vector<1x64xf32>
    %13 = vector.broadcast %12 : vector<1x64xf32> to vector<2x64xf32>
    %14 = arith.addf %11, %13 : vector<2x64xf32>
    %cst_11 = arith.constant 0.000000e+00 : f32
    %15 = vector.broadcast %cst_11 : f32 to vector<2x64xf32>
    %16 = arith.maximumf %14, %15 : vector<2x64xf32>
    %17 = arith.truncf %16 : vector<2x64xf32> to vector<2x64xbf16>
    %c0_12 = arith.constant 0 : index
    %c0_13 = arith.constant 0 : index
    %18 = vector.load %arg6[%c0_12, %c0_13] : memref<64x4xbf16, #tpu.memory_space<vmem>>, vector<64x4xbf16>
    %cst_14 = arith.constant dense<0.000000e+00> : vector<2x4xf32>
    %19 = tpu.matmul %17, %18, %cst_14 {dimension_numbers = #tpu.dot_dimension_numbers<[1], [0], [0], [1], [0, 0, 1, 1], [], []>} : vector<2x64xbf16>, vector<64x4xbf16>, vector<2x4xf32> -> vector<2x4xf32>
    %c0_15 = arith.constant 0 : index
    %c0_16 = arith.constant 0 : index
    %20 = vector.load %arg7[%c0_15, %c0_16] : memref<1x4xf32, #tpu.memory_space<vmem>>, vector<1x4xf32>
    %21 = vector.broadcast %20 : vector<1x4xf32> to vector<2x4xf32>
    %22 = arith.addf %19, %21 : vector<2x4xf32>
    %c0_17 = arith.constant 0 : index
    %c0_18 = arith.constant 0 : index
    %23 = vector.load %arg8[%c0_17, %c0_18] : memref<2x4xf32, #tpu.memory_space<vmem>>, vector<2x4xf32>
    tpu.vector_store %arg8[%c0_17, %c0_18], %22 {strides = array<i32>} : memref<2x4xf32, #tpu.memory_space<vmem>>, vector<2x4xf32>,
    return
  }
  func.func @transform_0(%arg0: i32) -> (i32, i32) {
    %c0_i32 = arith.constant 0 : i32
    %c0_i32_0 = arith.constant 0 : i32
    return %arg0, %c0_i32 : i32, i32
  }
  func.func @transform_1(%arg0: i32) -> (i32, i32) {
    %c0_i32 = arith.constant 0 : i32
    %c0_i32_0 = arith.constant 0 : i32
    %c0_i32_1 = arith.constant 0 : i32
    return %c0_i32, %c0_i32_0 : i32, i32
  }
  func.func @transform_2(%arg0: i32) -> (i32, i32) {
    %c0_i32 = arith.constant 0 : i32
    %c0_i32_0 = arith.constant 0 : i32
    %c0_i32_1 = arith.constant 0 : i32
    return %c0_i32, %c0_i32_0 : i32, i32
  }
  func.func @transform_3(%arg0: i32) -> (i32, i32) {
    %c0_i32 = arith.constant 0 : i32
    %c0_i32_0 = arith.constant 0 : i32
    %c0_i32_1 = arith.constant 0 : i32
    return %c0_i32, %c0_i32_0 : i32, i32
  }
  func.func @transform_4(%arg0: i32) -> (i32, i32) {
    %c0_i32 = arith.constant 0 : i32
    %c0_i32_0 = arith.constant 0 : i32
    %c0_i32_1 = arith.constant 0 : i32
    return %c0_i32, %c0_i32_0 : i32, i32
  }
  func.func @transform_5(%arg0: i32) -> (i32, i32) {
    %c0_i32 = arith.constant 0 : i32
    %c0_i32_0 = arith.constant 0 : i32
    %c0_i32_1 = arith.constant 0 : i32
    return %c0_i32, %c0_i32_0 : i32, i32
  }
  func.func @transform_6(%arg0: i32) -> (i32, i32) {
    %c0_i32 = arith.constant 0 : i32
    %c0_i32_0 = arith.constant 0 : i32
    %c0_i32_1 = arith.constant 0 : i32
    return %c0_i32, %c0_i32_0 : i32, i32
  }
  func.func @transform_7(%arg0: i32) -> (i32, i32) {
    %c0_i32 = arith.constant 0 : i32
    %c0_i32_0 = arith.constant 0 : i32
    return %arg0, %c0_i32 : i32, i32
  }
}

</mosaic_0001>

<llo_original>
// kernel: tpu_custom_call.1
$region0: #{tpu_custom_call.1}
  #allocation0 [shape = 'u32[]', space=smem, size = 0x4, offset = 0x4, fixed_abs, tag = 'smem constant byte address 0x4 - core index']
  #allocation1 [shape = 'u32[144,128]{1,0:T(1,128)}', space=vmem, size = 0x12000, scoped, tag = 'internal scratch']
  %s0 = inlined_call_operand.vmem [shape: f32[2,16], index: 0, kind: input, shape index: {}]
  %s1 = inlined_call_operand.vmem [shape: bf16[16,128], index: 1, kind: input, shape index: {}]
  %s2 = inlined_call_operand.vmem [shape: f32[1,128], index: 2, kind: input, shape index: {}]
  %s3 = inlined_call_operand.vmem [shape: bf16[128,64], index: 3, kind: input, shape index: {}]
  %s4 = inlined_call_operand.vmem [shape: f32[1,64], index: 4, kind: input, shape index: {}]
  %s5 = inlined_call_operand.vmem [shape: bf16[64,4], index: 5, kind: input, shape index: {}]
  %s6 = inlined_call_operand.vmem [shape: f32[1,4], index: 6, kind: input, shape index: {}]
  %s7 = inlined_call_operand.hbm [shape: f32[2,4], index: 7, kind: output, shape index: {}]
  %s8 = sld [smem:[#allocation0]]
  $region38: #{tpu_custom_call.1} parent=0
    _
  %s10 = ssub.s32 1, %s8
  %s11 = scalar_select 0, %s10, %s8
  $region1: #{tpu_custom_call.1} parent=0
    #allocation2 [shape = 'u8[1024]{0}', space=vmem, size = 0x400, scoped, tag = 'output window, operand 0, single buffered']
    #allocation3 [shape = 's32[1]{0}', space=sflag, size = 0x4, scoped, tag = 'scoped memory for tpu_custom_call.1']
    %12 = vsyncpa [#allocation3], 0
    // Predicated region
    $region2: #{tpu_custom_call.1} parent=1 // pred_check
      _
    $region3: #{tpu_custom_call.1} parent=1 // pred_check_branch
      %14 = sbr.rel (0) target = $region5
    $region4: #{tpu_custom_call.1} parent=1 // pred_region
      _
    $region5: #{tpu_custom_call.1} parent=1 // pred_fallthru
      _
    // Predicated region
    $region6: #{tpu_custom_call.1} parent=1 // pred_check
      _
    $region7: #{tpu_custom_call.1} parent=1 // pred_check_branch
      %16 = sbr.rel (0) target = $region9
    $region8: #{tpu_custom_call.1} parent=1 // pred_region
      _
    $region9: #{tpu_custom_call.1} parent=1 // pred_fallthru
      _
    // Predicated region
    $region10: #{tpu_custom_call.1} parent=1 // pred_check
      _
    $region11: #{tpu_custom_call.1} parent=1 // pred_check_branch
      %18 = sbr.rel (0) target = $region13
    $region12: #{tpu_custom_call.1} parent=1 // pred_region
      _
    $region13: #{tpu_custom_call.1} parent=1 // pred_fallthru
      _
    // Predicated region
    $region14: #{tpu_custom_call.1} parent=1 // pred_check
      _
    $region15: #{tpu_custom_call.1} parent=1 // pred_check_branch
      %20 = sbr.rel (0) target = $region17
    $region16: #{tpu_custom_call.1} parent=1 // pred_region
      _
    $region17: #{tpu_custom_call.1} parent=1 // pred_fallthru
      _
    // Predicated region
    $region18: #{tpu_custom_call.1} parent=1 // pred_check
      _
    $region19: #{tpu_custom_call.1} parent=1 // pred_check_branch
      %22 = sbr.rel (0) target = $region21
    $region20: #{tpu_custom_call.1} parent=1 // pred_region
      _
    $region21: #{tpu_custom_call.1} parent=1 // pred_fallthru
      _
    // Predicated region
    $region22: #{tpu_custom_call.1} parent=1 // pred_check
      _
    $region23: #{tpu_custom_call.1} parent=1 // pred_check_branch
      %24 = sbr.rel (0) target = $region25
    $region24: #{tpu_custom_call.1} parent=1 // pred_region
      _
    $region25: #{tpu_custom_call.1} parent=1 // pred_fallthru
      _
    // Predicated region
    $region26: #{tpu_custom_call.1} parent=1 // pred_check
      _
    $region27: #{tpu_custom_call.1} parent=1 // pred_check_branch
      %26 = sbr.rel (0) target = $region29
    $region28: #{tpu_custom_call.1} parent=1 // pred_region
      _
    $region29: #{tpu_custom_call.1} parent=1 // pred_fallthru
      _
    %v28 = vld [vmem:[%s0] sm:$0x3]
    %v29 = vpack.c.bf16 %v28, %v28
    %v30 = vld [vmem:[%s1] sm:$0xf]
    %v31 = vld [vmem:[%s1 + $0x4] sm:$0xf]
    %v32 = vld [vmem:[%s2] sm:$0x1]
    %v34 = vlaneseq
    %v35 = vshrl.u32 %v34, 7
    %v36 = vsub.s32 0, %v35
    %v37 = vrot.slane %v32, %v36
    %v41 = vunpack.c.l.b16 %v30
    %v42 = vunpack.c.l.b16 %v31
    %v43 = vpack.c.b16 %v42, %v41
    %vm45 = vcmask 130048
    %v47 = vsel %vm45, %v29, 0
    %49 = vmatprep.subr.bf16.mxu0 0
    %50 = vmatpush1.bf16.msra.mxu0 0
    %51 = vmatprep.subr.bf16.mxu0 0
    %52 = vmatpush1.bf16.msra.mxu0 0
    %53 = vmatprep.subr.bf16.mxu0 0
    %54 = vmatpush1.bf16.msra.mxu0 0
    %55 = vmatprep.subr.bf16.mxu0 0
    %56 = vmatpush1.bf16.msra.mxu0 0
    %57 = vmatprep.subr.bf16.mxu0 0
    %58 = vmatpush1.bf16.msra.mxu0 0
    %59 = vmatprep.subr.bf16.mxu0 0
    %60 = vmatpush1.bf16.msra.mxu0 0
    %61 = vmatprep.subr.bf16.mxu0 0
    %62 = vmatpush1.bf16.msra.mxu0 0
    %63 = vmatprep.subr.bf16.mxu0 0
    %64 = vmatpush1.bf16.msra.mxu0 %v43
    %65 = vmatprep.subr.bf16.mxu0 0
    %66 = vmatpush2.bf16.msra.mxu0 0
    %67 = vmatprep.subr.bf16.mxu0 0
    %68 = vmatpush2.bf16.msra.mxu0 0
    %69 = vmatprep.subr.bf16.mxu0 0
    %70 = vmatpush2.bf16.msra.mxu0 0
    %71 = vmatprep.subr.bf16.mxu0 0
    %72 = vmatpush2.bf16.msra.mxu0 0
    %73 = vmatprep.subr.bf16.mxu0 0
    %74 = vmatpush2.bf16.msra.mxu0 0
    %75 = vmatprep.subr.bf16.mxu0 0
    %76 = vmatpush2.bf16.msra.mxu0 0
    %77 = vmatprep.subr.bf16.mxu0 0
    %78 = vmatpush2.bf16.msra.mxu0 0
    %79 = vmatprep.subr.bf16.mxu0 0
    %80 = vmatpush2.bf16.msra.mxu0 0
    %81 = vmatprep.mubr.bf16.mxu0 0
    %82 = vmatmul.mubr.bf16.gmra.mxu0 %v47
    %v83 = vpop.f32.mrf.mxu0
    %v84 = vadd.f32 %v37, %v83
    %v85 = vpop.f32.mrf.mxu0
    %v86 = vpop.f32.mrf.mxu0
    %v87 = vpop.f32.mrf.mxu0
    %88 = vdwg.mxu0
    %v89 = vmax.f32 %v84, 0.0
    %v90 = vpack.c.bf16 %v89, %v89
    %v91 = vld [vmem:[%s3] sm:$0xf]
    %v92 = vld [vmem:[%s3 + $0x4] sm:$0xf]
    %v93 = vld [vmem:[%s3 + $0x8] sm:$0xf]
    %v94 = vld [vmem:[%s3 + $0xc] sm:$0xf]
    %v95 = vld [vmem:[%s3 + $0x10] sm:$0xf]
    %v96 = vld [vmem:[%s3 + $0x14] sm:$0xf]
    %v97 = vld [vmem:[%s3 + $0x18] sm:$0xf]
    %v98 = vld [vmem:[%s3 + $0x1c] sm:$0xf]
    %v99 = vld [vmem:[%s3 + $0x20] sm:$0xf]
    %v100 = vld [vmem:[%s3 + $0x24] sm:$0xf]
    %v101 = vld [vmem:[%s3 + $0x28] sm:$0xf]
    %v102 = vld [vmem:[%s3 + $0x2c] sm:$0xf]
    %v103 = vld [vmem:[%s3 + $0x30] sm:$0xf]
    %v104 = vld [vmem:[%s3 + $0x34] sm:$0xf]
    %v105 = vld [vmem:[%s3 + $0x38] sm:$0xf]
    %v106 = vld [vmem:[%s3 + $0x3c] sm:$0xf]
    %v107 = vld [vmem:[%s4] sm:$0x1]
    %v109 = vlaneseq
    %v110 = vshrl.u32 %v109, 7
    %v111 = vsub.s32 0, %v110
    %v112 = vrot.slane %v107, %v111
    %v130 = vunpack.c.l.b16 %v91
    %v131 = vunpack.c.l.b16 %v92
    %v132 = vunpack.c.l.b16 %v93
    %v133 = vunpack.c.l.b16 %v94
    %v134 = vunpack.c.l.b16 %v95
    %v135 = vunpack.c.l.b16 %v96
    %v136 = vunpack.c.l.b16 %v97
    %v137 = vunpack.c.l.b16 %v98
    %v138 = vunpack.c.l.b16 %v99
    %v139 = vunpack.c.l.b16 %v100
    %v140 = vunpack.c.l.b16 %v101
    %v141 = vunpack.c.l.b16 %v102
    %v142 = vunpack.c.l.b16 %v103
    %v143 = vunpack.c.l.b16 %v104
    %v144 = vunpack.c.l.b16 %v105
    %v145 = vunpack.c.l.b16 %v106
    %v146 = vpack.c.b16 %v131, %v130
    %v147 = vpack.c.b16 %v133, %v132
    %v148 = vpack.c.b16 %v135, %v134
    %v149 = vpack.c.b16 %v137, %v136
    %v150 = vpack.c.b16 %v139, %v138
    %v151 = vpack.c.b16 %v141, %v140
    %v152 = vpack.c.b16 %v143, %v142
    %v153 = vpack.c.b16 %v145, %v144
    %162 = vmatprep.subr.bf16.mxu0 0
    %163 = vmatpush1.bf16.msra.mxu0 %v153
    %164 = vmatprep.subr.bf16.mxu0 0
    %165 = vmatpush1.bf16.msra.mxu0 %v152
    %166 = vmatprep.subr.bf16.mxu0 0
    %167 = vmatpush1.bf16.msra.mxu0 %v151
    %168 = vmatprep.subr.bf16.mxu0 0
    %169 = vmatpush1.bf16.msra.mxu0 %v150
    %170 = vmatprep.subr.bf16.mxu0 0
    %171 = vmatpush1.bf16.msra.mxu0 %v149
    %172 = vmatprep.subr.bf16.mxu0 0
    %173 = vmatpush1.bf16.msra.mxu0 %v148
    %174 = vmatprep.subr.bf16.mxu0 0
    %175 = vmatpush1.bf16.msra.mxu0 %v147
    %176 = vmatprep.subr.bf16.mxu0 0
    %177 = vmatpush1.bf16.msra.mxu0 %v146
    %178 = vmatprep.subr.bf16.mxu0 0
    %179 = vmatpush2.bf16.msra.mxu0 0
    %180 = vmatprep.subr.bf16.mxu0 0
    %181 = vmatpush2.bf16.msra.mxu0 0
    %182 = vmatprep.subr.bf16.mxu0 0
    %183 = vmatpush2.bf16.msra.mxu0 0
    %184 = vmatprep.subr.bf16.mxu0 0
    %185 = vmatpush2.bf16.msra.mxu0 0
    %186 = vmatprep.subr.bf16.mxu0 0
    %187 = vmatpush2.bf16.msra.mxu0 0
    %188 = vmatprep.subr.bf16.mxu0 0
    %189 = vmatpush2.bf16.msra.mxu0 0
    %190 = vmatprep.subr.bf16.mxu0 0
    %191 = vmatpush2.bf16.msra.mxu0 0
    %192 = vmatprep.subr.bf16.mxu0 0
    %193 = vmatpush2.bf16.msra.mxu0 0
    %194 = vmatprep.mubr.bf16.mxu0 0
    %195 = vmatmul.mubr.bf16.gmra.mxu0 %v90
    %v196 = vpop.f32.mrf.mxu0
    %v197 = vadd.f32 %v112, %v196
    %v198 = vpop.f32.mrf.mxu0
    %v199 = vpop.f32.mrf.mxu0
    %v200 = vpop.f32.mrf.mxu0
    %201 = vdwg.mxu0
    %v202 = vmax.f32 %v197, 0.0
    %v203 = vpack.c.bf16 %v202, %v202
    %v204 = vld [vmem:[%s5] sm:$0xf]
    %v205 = vld [vmem:[%s5 + $0x4] sm:$0xf]
    %v206 = vld [vmem:[%s5 + $0x8] sm:$0xf]
    %v207 = vld [vmem:[%s5 + $0xc] sm:$0xf]
    %v208 = vld [vmem:[%s5 + $0x10] sm:$0xf]
    %v209 = vld [vmem:[%s5 + $0x14] sm:$0xf]
    %v210 = vld [vmem:[%s5 + $0x18] sm:$0xf]
    %v211 = vld [vmem:[%s5 + $0x1c] sm:$0xf]
    %v212 = vld [vmem:[%s6] sm:$0x1]
    %v214 = vlaneseq
    %v215 = vshrl.u32 %v214, 7
    %v216 = vsub.s32 0, %v215
    %v217 = vrot.slane %v212, %v216
    %v227 = vunpack.c.l.b16 %v204
    %v228 = vunpack.c.l.b16 %v205
    %v229 = vunpack.c.l.b16 %v206
    %v230 = vunpack.c.l.b16 %v207
    %v231 = vunpack.c.l.b16 %v208
    %v232 = vunpack.c.l.b16 %v209
    %v233 = vunpack.c.l.b16 %v210
    %v234 = vunpack.c.l.b16 %v211
    %v235 = vpack.c.b16 %v228, %v227
    %v236 = vpack.c.b16 %v230, %v229
    %v237 = vpack.c.b16 %v232, %v231
    %v238 = vpack.c.b16 %v234, %v233
    %vm243 = vcmask 523264
    %v245 = vsel %vm243, %v203, 0
    %247 = vmatprep.subr.bf16.mxu0 0
    %248 = vmatpush1.bf16.msra.mxu0 0
    %249 = vmatprep.subr.bf16.mxu0 0
    %250 = vmatpush1.bf16.msra.mxu0 0
    %251 = vmatprep.subr.bf16.mxu0 0
    %252 = vmatpush1.bf16.msra.mxu0 0
    %253 = vmatprep.subr.bf16.mxu0 0
    %254 = vmatpush1.bf16.msra.mxu0 0
    %255 = vmatprep.subr.bf16.mxu0 0
    %256 = vmatpush1.bf16.msra.mxu0 %v238
    %257 = vmatprep.subr.bf16.mxu0 0
    %258 = vmatpush1.bf16.msra.mxu0 %v237
    %259 = vmatprep.subr.bf16.mxu0 0
    %260 = vmatpush1.bf16.msra.mxu0 %v236
    %261 = vmatprep.subr.bf16.mxu0 0
    %262 = vmatpush1.bf16.msra.mxu0 %v235
    %263 = vmatprep.subr.bf16.mxu0 0
    %264 = vmatpush2.bf16.msra.mxu0 0
    %265 = vmatprep.subr.bf16.mxu0 0
    %266 = vmatpush2.bf16.msra.mxu0 0
    %267 = vmatprep.subr.bf16.mxu0 0
    %268 = vmatpush2.bf16.msra.mxu0 0
    %269 = vmatprep.subr.bf16.mxu0 0
    %270 = vmatpush2.bf16.msra.mxu0 0
    %271 = vmatprep.subr.bf16.mxu0 0
    %272 = vmatpush2.bf16.msra.mxu0 0
    %273 = vmatprep.subr.bf16.mxu0 0
    %274 = vmatpush2.bf16.msra.mxu0 0
    %275 = vmatprep.subr.bf16.mxu0 0
    %276 = vmatpush2.bf16.msra.mxu0 0
    %277 = vmatprep.subr.bf16.mxu0 0
    %278 = vmatpush2.bf16.msra.mxu0 0
    %279 = vmatprep.mubr.bf16.mxu0 0
    %280 = vmatmul.mubr.bf16.gmra.mxu0 %v245
    %v281 = vpop.f32.mrf.mxu0
    %v282 = vadd.f32 %v217, %v281
    %v283 = vpop.f32.mrf.mxu0
    %v284 = vpop.f32.mrf.mxu0
    %v285 = vpop.f32.mrf.mxu0
    %286 = vdwg.mxu0
    %vm287 = vcmask 25600
    %288 = vst.msk [vmem:[#allocation2] sm:$0x3] %vm287, %v282
    // Predicated region
    $region30: #{tpu_custom_call.1} parent=1 // pred_check
      _
    $region31: #{tpu_custom_call.1} parent=1 // pred_check_branch
      %290 = sbr.rel (0) target = $region33
    $region32: #{tpu_custom_call.1} parent=1 // pred_region
      %s292 = ssub.s32 32, 32
      %293 = vsyncadd [#allocation3], %s292
      %s295 = sshll.u32 [#allocation2], 4
      %s296 = int_to_ptr.vmem [resolvable:$true] %s295
      %298 = dma.vmem_to_hbm [thread:$0]  %s296, 32, %s7, [#allocation3]
    $region33: #{tpu_custom_call.1} parent=1 // pred_fallthru
      _
    // Predicated region
    $region34: #{tpu_custom_call.1} parent=1 // pred_check
      _
    $region35: #{tpu_custom_call.1} parent=1 // pred_check_branch
      %300 = sbr.rel (0) target = $region37
    $region36: #{tpu_custom_call.1} parent=1 // pred_region
      %301 = dma.done [#allocation3], 32
    $region37: #{tpu_custom_call.1} parent=1 // pred_fallthru
      _
    %302 = vsyncpa [#allocation3], 1

</llo_original>
